<compile_context>
chip_gen: v5e
topology: v5e:2x2
jax: 0.10.0
libtpu: 0.0.40
codegen_flags: <defaults>
</compile_context>

<pallas_src>
import jax
import jax.numpy as jnp
from jax import lax
from jax.experimental import pallas as pl
from jax.experimental.pallas import tpu as pltpu


def _round_up(x: int, m: int) -> int:
    return ((x + m - 1) // m) * m


def _largest_dividing_tile(n: int, t: int, m: int) -> int:
    """Largest multiple of `m` that is <= t and divides n exactly, if one
    exists; otherwise t (caller pads).  Avoids wrapper-side pad/slice passes
    over the full tables whenever possible."""
    if n % m == 0:
        for cand in range(t, m - 1, -m):
            if n % cand == 0:
                return cand
    return t


# ---------------------------------------------------------------------------
# forward(): xui[b] = sum_d gu[b, d] * gi[b, d]
# ---------------------------------------------------------------------------
def _forward_kernel(gu_ref, gi_ref, out_ref):
    # bf16 tiles are upcast in-vreg (free filler on a mem-bound kernel);
    # the elementwise product and the reduction are both f32.
    prod = gu_ref[...].astype(jnp.float32) * gi_ref[...].astype(jnp.float32)
    # Row-reduce with a ones-vector matmul so the result lands lane-dense as
    # [1, TB] (full unmasked vst) instead of a masked [TB, 1] column store.
    ones = jnp.ones((1, prod.shape[1]), jnp.float32)
    out_ref[...] = lax.dot_general(
        ones, prod,
        dimension_numbers=(((1,), (1,)), ((), ())),
        preferred_element_type=jnp.float32,
    )


def pinsage_forward(gu, gi, *, block_b: int = 2048):
    """gu, gi: [B, D] -> xui: [B] float32 (== torch.sum(gu * gi, 1))."""
    assert gu.shape == gi.shape and gu.ndim == 2
    B, D = gu.shape
    # bf16 streaming halves HBM reads; skip the cast if already bf16 upstream.
    if gu.dtype != jnp.bfloat16:
        gu = gu.astype(jnp.bfloat16)
    if gi.dtype != jnp.bfloat16:
        gi = gi.astype(jnp.bfloat16)

    tb = min(block_b, _round_up(B, 128))    # output last dim: multiple of 128
    # Keep 2 inputs x 2 pipeline buffers of bf16 under ~12 MiB of VMEM.
    while tb > 128 and 4 * tb * D * 2 > 12 * 1024 * 1024:
        tb //= 2
    tb = _largest_dividing_tile(B, tb, 128)
    b_pad = _round_up(B, tb)
    if b_pad != B:
        gu = jnp.pad(gu, ((0, b_pad - B), (0, 0)))
        gi = jnp.pad(gi, ((0, b_pad - B), (0, 0)))

    out = pl.pallas_call(
        _forward_kernel,
        out_shape=jax.ShapeDtypeStruct((1, b_pad), jnp.float32),
        grid=(b_pad // tb,),
        in_specs=[
            pl.BlockSpec((tb, D), lambda i: (i, 0)),
            pl.BlockSpec((tb, D), lambda i: (i, 0)),
        ],
        out_specs=pl.BlockSpec((1, tb), lambda i: (0, i)),
        compiler_params=pltpu.CompilerParams(
            dimension_semantics=("parallel",),
            vmem_limit_bytes=32 * 1024 * 1024,
        ),
        cost_estimate=pl.CostEstimate(
            flops=2 * b_pad * D,
            transcendentals=0,
            bytes_accessed=2 * b_pad * D * 2 + b_pad * 4,
        ),
    )(gu, gi)
    row = out[0]
    return row if b_pad == B else row[:B]


# ---------------------------------------------------------------------------
# predict(): scores = gu @ gi.T     (tiled MXU matmul, bf16 in / f32 acc)
# ---------------------------------------------------------------------------
def _predict_kernel(gu_ref, gi_ref, out_ref):
    # Contract on the last axis of BOTH operands: gi stays in its native
    # [TI, D] layout (no per-tile XLU transpose, no extra RHS vreg pressure).
    out_ref[...] = lax.dot_general(
        gu_ref[...], gi_ref[...],
        dimension_numbers=(((1,), (1,)), ((), ())),
        preferred_element_type=jnp.float32,
    )


def pinsage_predict(gu, gi, *, block_u: int = 512, block_i: int = 512):
    """gu: [U, D], gi: [I, D] -> scores: [U, I] float32 (== gu @ gi.T)."""
    U, D = gu.shape
    I, D2 = gi.shape
    assert D == D2
    # bf16 feeds the MXU at full rate and halves HBM reads of both tables;
    # the accumulator stays f32 via preferred_element_type.  Callers keeping
    # the embedding tables in bf16 upstream skip this extra HBM pass.
    if gu.dtype != jnp.bfloat16:
        gu = gu.astype(jnp.bfloat16)
    if gi.dtype != jnp.bfloat16:
        gi = gi.astype(jnp.bfloat16)

    # tu: multiple of 16 (bf16 sublane packing); ti: multiple of 128 (MXU
    # shape, lane-dense unmasked output stores).
    tu = min(block_u, _round_up(U, 16))
    ti = min(block_i, _round_up(I, 128))

    # Cap the double-buffered VMEM footprint at ~24 MiB so the same tile
    # table fits v7x (64 MiB physical) as well as v5e/v6e (128 MiB).
    def _footprint(tu_, ti_):
        return 2 * (tu_ * D + ti_ * D) * 2 + 2 * tu_ * ti_ * 4
    budget = 24 * 1024 * 1024
    while _footprint(tu, ti) > budget and ti > 128:
        ti //= 2
    while _footprint(tu, ti) > budget and tu > 16:
        tu //= 2

    # Prefer tiles that divide U / I exactly: no full-table pad before the
    # kernel, no full-output slice copy after it.
    tu = _largest_dividing_tile(U, tu, 16)
    ti = _largest_dividing_tile(I, ti, 128)
    u_pad = _round_up(U, tu)
    i_pad = _round_up(I, ti)
    if u_pad != U:
        gu = jnp.pad(gu, ((0, u_pad - U), (0, 0)))
    if i_pad != I:
        gi = jnp.pad(gi, ((0, i_pad - I), (0, 0)))

    # D (= out_weight_size[-1]) fits in a single block: no K grid axis.
    # j (items) is the inner axis, so gi is re-streamed u_pad/tu times —
    # reflected in bytes_accessed below; larger tu is the main HBM lever.
    out = pl.pallas_call(
        _predict_kernel,
        out_shape=jax.ShapeDtypeStruct((u_pad, i_pad), jnp.float32),
        grid=(u_pad // tu, i_pad // ti),
        in_specs=[
            pl.BlockSpec((tu, D), lambda i, j: (i, 0)),
            pl.BlockSpec((ti, D), lambda i, j: (j, 0)),
        ],
        out_specs=pl.BlockSpec((tu, ti), lambda i, j: (i, j)),
        compiler_params=pltpu.CompilerParams(
            dimension_semantics=("parallel", "parallel"),
            # Above the 16 MiB (v5e) / 32 MiB (v6e, v7x) scoped defaults,
            # below v7x's 64 MiB physical VMEM.
            vmem_limit_bytes=48 * 1024 * 1024,
        ),
        cost_estimate=pl.CostEstimate(
            flops=2 * u_pad * i_pad * D,
            transcendentals=0,
            bytes_accessed=(u_pad * D * 2
                            + (u_pad // tu) * i_pad * D * 2
                            + u_pad * i_pad * 4),
        ),
    )(gu, gi)
    if u_pad == U and i_pad == I:
        return out
    return out[:U, :I]


if __name__ == "__main__":
    # Small deterministic setup consistent with the module:
    # out_weight_size[-1] is the final embedding dim fed into forward().
    num_users = 8
    num_items = 16
    embed_out = 32   # out_weight_size_list[-1]
    batch = 8

    key = jax.random.PRNGKey(0)
    k_gu, k_gi, k_u, k_p = jax.random.split(key, 4)

    # Stand-in for propagate_embeddings() outputs.
    gu_all = jax.random.normal(k_gu, (num_users, embed_out), dtype=jnp.float32)
    gi_all = jax.random.normal(k_gi, (num_items, embed_out), dtype=jnp.float32)

    # Training batch: user indices and positive item indices (gather done by
    # XLA in the wrapper; see TODO at the top about fusing it into the kernel).
    users = jax.random.randint(k_u, (batch,), 0, num_users)
    pos = jax.random.randint(k_p, (batch,), 0, num_items)
    gu_batch = gu_all[users]   # [B, D]
    gi_batch = gi_all[pos]     # [B, D]

    # bf16-rounded references (kernels intentionally stream bf16 inputs with
    # f32 accumulation).
    gu_b32 = gu_batch.astype(jnp.bfloat16).astype(jnp.float32)
    gi_b32 = gi_batch.astype(jnp.bfloat16).astype(jnp.float32)
    gu_all_b32 = gu_all.astype(jnp.bfloat16).astype(jnp.float32)
    gi_all_b32 = gi_all.astype(jnp.bfloat16).astype(jnp.float32)

    # --- forward ---
    xui = jax.block_until_ready(pinsage_forward(gu_batch, gi_batch))
    xui_ref = jnp.sum(gu_b32 * gi_b32, axis=1)
    assert xui.shape == (batch,)
    assert jnp.allclose(xui, xui_ref, atol=1e-3, rtol=1e-3)

    # --- predict ---
    scores = jax.block_until_ready(pinsage_predict(gu_all, gi_all))
    scores_ref = gu_all_b32 @ gi_all_b32.T
    assert scores.shape == (num_users, num_items)
    assert jnp.allclose(scores, scores_ref, atol=1e-3, rtol=1e-3)

    print("KERNEL_OK")
</pallas_src>

<mosaic_0001>
module attributes {stable_mosaic.version = 11 : i64} {
  func.func @_forward_kernel(%arg0: i32, %arg1: memref<128x32xbf16, #tpu.memory_space<vmem>>, %arg2: memref<128x32xbf16, #tpu.memory_space<vmem>>, %arg3: memref<1x128xf32, #tpu.memory_space<vmem>>) attributes {dimension_semantics = [#tpu.dimension_semantics<parallel>], iteration_bounds = array<i64: 1>, scalar_prefetch = 0 : i64, scratch_operands = 0 : i64, tpu.core_type = #tpu.core_type<tc>, window_params = [{transform_indices = @transform_0, window_bounds = array<i64: 128, 32>}, {transform_indices = @transform_1, window_bounds = array<i64: 128, 32>}, {transform_indices = @transform_2, window_bounds = array<i64: 1, 128>}]} {
    %c0 = arith.constant 0 : index
    %c0_0 = arith.constant 0 : index
    %0 = vector.load %arg1[%c0, %c0_0] : memref<128x32xbf16, #tpu.memory_space<vmem>>, vector<128x32xbf16>
    %1 = arith.extf %0 : vector<128x32xbf16> to vector<128x32xf32>
    %c0_1 = arith.constant 0 : index
    %c0_2 = arith.constant 0 : index
    %2 = vector.load %arg2[%c0_1, %c0_2] : memref<128x32xbf16, #tpu.memory_space<vmem>>, vector<128x32xbf16>
    %3 = arith.extf %2 : vector<128x32xbf16> to vector<128x32xf32>
    %4 = arith.mulf %1, %3 : vector<128x32xf32>
    %cst = arith.constant 1.000000e+00 : f32
    %5 = vector.broadcast %cst : f32 to vector<1x32xf32>
    %cst_3 = arith.constant dense<0.000000e+00> : vector<1x128xf32>
    %6 = tpu.matmul %5, %4, %cst_3 {dimension_numbers = #tpu.dot_dimension_numbers<[1], [1], [0], [0], [0, 0, 1, 0], [], []>} : vector<1x32xf32>, vector<128x32xf32>, vector<1x128xf32> -> vector<1x128xf32>
    %c0_4 = arith.constant 0 : index
    %c0_5 = arith.constant 0 : index
    %7 = vector.load %arg3[%c0_4, %c0_5] : memref<1x128xf32, #tpu.memory_space<vmem>>, vector<1x128xf32>
    tpu.vector_store %arg3[%c0_4, %c0_5], %6 {strides = array<i32>} : memref<1x128xf32, #tpu.memory_space<vmem>>, vector<1x128xf32>,
    return
  }
  func.func @transform_0(%arg0: i32) -> (i32, i32) {
    %c0_i32 = arith.constant 0 : i32
    %c0_i32_0 = arith.constant 0 : i32
    return %arg0, %c0_i32 : i32, i32
  }
  func.func @transform_1(%arg0: i32) -> (i32, i32) {
    %c0_i32 = arith.constant 0 : i32
    %c0_i32_0 = arith.constant 0 : i32
    return %arg0, %c0_i32 : i32, i32
  }
  func.func @transform_2(%arg0: i32) -> (i32, i32) {
    %c0_i32 = arith.constant 0 : i32
    %c0_i32_0 = arith.constant 0 : i32
    return %c0_i32, %arg0 : i32, i32
  }
}

</mosaic_0001>

<llo_original>
// kernel: tpu_custom_call.1
$region0: #{tpu_custom_call.1}
  #allocation0 [shape = 'u32[]', space=smem, size = 0x4, offset = 0x4, fixed_abs, tag = 'smem constant byte address 0x4 - core index']
  #allocation1 [shape = 'u32[72,128]{1,0:T(1,128)}', space=vmem, size = 0x9000, scoped, tag = 'internal scratch']
  %s0 = inlined_call_operand.vmem [shape: bf16[128,32], index: 0, kind: input, shape index: {}]
  %s1 = inlined_call_operand.vmem [shape: bf16[128,32], index: 1, kind: input, shape index: {}]
  %s2 = inlined_call_operand.hbm [shape: f32[1,128], index: 2, kind: output, shape index: {}]
  %s3 = sld [smem:[#allocation0]]
  $region18: #{tpu_custom_call.1} parent=0
    _
  %s5 = ssub.s32 1, %s3
  %s6 = scalar_select 0, %s5, %s3
  $region1: #{tpu_custom_call.1} parent=0
    #allocation2 [shape = 'u8[512]{0}', space=vmem, size = 0x400, scoped, tag = 'output window, operand 0, single buffered']
    #allocation3 [shape = 's32[1]{0}', space=sflag, size = 0x4, scoped, tag = 'scoped memory for tpu_custom_call.1']
    %7 = vsyncpa [#allocation3], 0
    // Predicated region
    $region2: #{tpu_custom_call.1} parent=1 // pred_check
      _
    $region3: #{tpu_custom_call.1} parent=1 // pred_check_branch
      %9 = sbr.rel (0) target = $region5
    $region4: #{tpu_custom_call.1} parent=1 // pred_region
      _
    $region5: #{tpu_custom_call.1} parent=1 // pred_fallthru
      _
    // Predicated region
    $region6: #{tpu_custom_call.1} parent=1 // pred_check
      _
    $region7: #{tpu_custom_call.1} parent=1 // pred_check_branch
      %11 = sbr.rel (0) target = $region9
    $region8: #{tpu_custom_call.1} parent=1 // pred_region
      _
    $region9: #{tpu_custom_call.1} parent=1 // pred_fallthru
      _
    %v12 = vld [vmem:[%s0] sm:$0xf]
    %v13 = vld [vmem:[%s0 + $0x4] sm:$0xf]
    %v14 = vld [vmem:[%s0 + $0x8] sm:$0xf]
    %v15 = vld [vmem:[%s0 + $0xc] sm:$0xf]
    %v16 = vld [vmem:[%s0 + $0x10] sm:$0xf]
    %v17 = vld [vmem:[%s0 + $0x14] sm:$0xf]
    %v18 = vld [vmem:[%s0 + $0x18] sm:$0xf]
    %v19 = vld [vmem:[%s0 + $0x1c] sm:$0xf]
    %v20 = vld [vmem:[%s0 + $0x20] sm:$0xf]
    %v21 = vld [vmem:[%s0 + $0x24] sm:$0xf]
    %v22 = vld [vmem:[%s0 + $0x28] sm:$0xf]
    %v23 = vld [vmem:[%s0 + $0x2c] sm:$0xf]
    %v24 = vld [vmem:[%s0 + $0x30] sm:$0xf]
    %v25 = vld [vmem:[%s0 + $0x34] sm:$0xf]
    %v26 = vld [vmem:[%s0 + $0x38] sm:$0xf]
    %v27 = vld [vmem:[%s0 + $0x3c] sm:$0xf]
    %v28 = vunpack.c.l.bf16 %v12
    %v29 = vunpack.c.l.bf16 %v13
    %v30 = vunpack.c.l.bf16 %v14
    %v31 = vunpack.c.l.bf16 %v15
    %v32 = vunpack.c.l.bf16 %v16
    %v33 = vunpack.c.l.bf16 %v17
    %v34 = vunpack.c.l.bf16 %v18
    %v35 = vunpack.c.l.bf16 %v19
    %v36 = vunpack.c.l.bf16 %v20
    %v37 = vunpack.c.l.bf16 %v21
    %v38 = vunpack.c.l.bf16 %v22
    %v39 = vunpack.c.l.bf16 %v23
    %v40 = vunpack.c.l.bf16 %v24
    %v41 = vunpack.c.l.bf16 %v25
    %v42 = vunpack.c.l.bf16 %v26
    %v43 = vunpack.c.l.bf16 %v27
    %v44 = vld [vmem:[%s1] sm:$0xf]
    %v45 = vld [vmem:[%s1 + $0x4] sm:$0xf]
    %v46 = vld [vmem:[%s1 + $0x8] sm:$0xf]
    %v47 = vld [vmem:[%s1 + $0xc] sm:$0xf]
    %v48 = vld [vmem:[%s1 + $0x10] sm:$0xf]
    %v49 = vld [vmem:[%s1 + $0x14] sm:$0xf]
    %v50 = vld [vmem:[%s1 + $0x18] sm:$0xf]
    %v51 = vld [vmem:[%s1 + $0x1c] sm:$0xf]
    %v52 = vld [vmem:[%s1 + $0x20] sm:$0xf]
    %v53 = vld [vmem:[%s1 + $0x24] sm:$0xf]
    %v54 = vld [vmem:[%s1 + $0x28] sm:$0xf]
    %v55 = vld [vmem:[%s1 + $0x2c] sm:$0xf]
    %v56 = vld [vmem:[%s1 + $0x30] sm:$0xf]
    %v57 = vld [vmem:[%s1 + $0x34] sm:$0xf]
    %v58 = vld [vmem:[%s1 + $0x38] sm:$0xf]
    %v59 = vld [vmem:[%s1 + $0x3c] sm:$0xf]
    %v60 = vunpack.c.l.bf16 %v44
    %v61 = vunpack.c.l.bf16 %v45
    %v62 = vunpack.c.l.bf16 %v46
    %v63 = vunpack.c.l.bf16 %v47
    %v64 = vunpack.c.l.bf16 %v48
    %v65 = vunpack.c.l.bf16 %v49
    %v66 = vunpack.c.l.bf16 %v50
    %v67 = vunpack.c.l.bf16 %v51
    %v68 = vunpack.c.l.bf16 %v52
    %v69 = vunpack.c.l.bf16 %v53
    %v70 = vunpack.c.l.bf16 %v54
    %v71 = vunpack.c.l.bf16 %v55
    %v72 = vunpack.c.l.bf16 %v56
    %v73 = vunpack.c.l.bf16 %v57
    %v74 = vunpack.c.l.bf16 %v58
    %v75 = vunpack.c.l.bf16 %v59
    %v76 = vmul.f32 %v28, %v60
    %v77 = vmul.f32 %v29, %v61
    %v78 = vmul.f32 %v30, %v62
    %v79 = vmul.f32 %v31, %v63
    %v80 = vmul.f32 %v32, %v64
    %v81 = vmul.f32 %v33, %v65
    %v82 = vmul.f32 %v34, %v66
    %v83 = vmul.f32 %v35, %v67
    %v84 = vmul.f32 %v36, %v68
    %v85 = vmul.f32 %v37, %v69
    %v86 = vmul.f32 %v38, %v70
    %v87 = vmul.f32 %v39, %v71
    %v88 = vmul.f32 %v40, %v72
    %v89 = vmul.f32 %v41, %v73
    %v90 = vmul.f32 %v42, %v74
    %v91 = vmul.f32 %v43, %v75
    %vm92 = vcmask 261120
    %v94 = vsel %vm92, 1.0, 0
    %v97 = vsel %vm92, %v76, 0
    %v100 = vsel %vm92, %v77, 0
    %v103 = vsel %vm92, %v78, 0
    %v106 = vsel %vm92, %v79, 0
    %v109 = vsel %vm92, %v80, 0
    %v112 = vsel %vm92, %v81, 0
    %v115 = vsel %vm92, %v82, 0
    %v118 = vsel %vm92, %v83, 0
    %v121 = vsel %vm92, %v84, 0
    %v124 = vsel %vm92, %v85, 0
    %v127 = vsel %vm92, %v86, 0
    %v130 = vsel %vm92, %v87, 0
    %v133 = vsel %vm92, %v88, 0
    %v136 = vsel %vm92, %v89, 0
    %v139 = vsel %vm92, %v90, 0
    %v142 = vsel %vm92, %v91, 0
    %144 = vmatpush.xpose.msra.mxu0 %v142
    %145 = vmatpush.xpose.msra.mxu0 %v139
    %146 = vmatpush.xpose.msra.mxu0 %v136
    %147 = vmatpush.xpose.msra.mxu0 %v133
    %148 = vmatpush.xpose.msra.mxu0 %v130
    %149 = vmatpush.xpose.msra.mxu0 %v127
    %150 = vmatpush.xpose.msra.mxu0 %v124
    %151 = vmatpush.xpose.msra.mxu0 %v121
    %152 = vmatpush.xpose.msra.mxu0 %v118
    %153 = vmatpush.xpose.msra.mxu0 %v115
    %154 = vmatpush.xpose.msra.mxu0 %v112
    %155 = vmatpush.xpose.msra.mxu0 %v109
    %156 = vmatpush.xpose.msra.mxu0 %v106
    %157 = vmatpush.xpose.msra.mxu0 %v103
    %158 = vmatpush.xpose.msra.mxu0 %v100
    %159 = vmatpush.xpose.msra.mxu0 %v97
    %160 = vmatmul.f32.gmra.mxu0 %v94
    %v161 = vpop.f32.mrf.mxu0
    %v162 = vadd.f32 0.0, %v161
    %163 = vdwg.mxu0
    %164 = vst [vmem:[#allocation2] sm:$0x1] %v162
    // Predicated region
    $region10: #{tpu_custom_call.1} parent=1 // pred_check
      _
    $region11: #{tpu_custom_call.1} parent=1 // pred_check_branch
      %166 = sbr.rel (0) target = $region13
    $region12: #{tpu_custom_call.1} parent=1 // pred_region
      %168 = vsyncadd [#allocation3], 0
      %s170 = sshll.u32 [#allocation2], 4
      %s171 = int_to_ptr.vmem [resolvable:$true] %s170
      %s172 = sshll.u32 %s2, 4
      %s173 = int_to_ptr.hbm [resolvable:$true] %s172
      %175 = dma.vmem_to_hbm [thread:$0]  %s171, 16, %s173, [#allocation3]
    $region13: #{tpu_custom_call.1} parent=1 // pred_fallthru
      _
    // Predicated region
    $region14: #{tpu_custom_call.1} parent=1 // pred_check
      _
    $region15: #{tpu_custom_call.1} parent=1 // pred_check_branch
      %177 = sbr.rel (0) target = $region17
    $region16: #{tpu_custom_call.1} parent=1 // pred_region
      %179 = dma.done [#allocation3], 16
    $region17: #{tpu_custom_call.1} parent=1 // pred_fallthru
      _
    %180 = vsyncpa [#allocation3], 1

</llo_original>
